<compile_context>
chip_gen: v7x
topology: tpu7x:2x2x1
jax: 0.10.0
libtpu: 0.0.40
codegen_flags: <defaults>
</compile_context>

<pallas_src>
import numpy as np
import jax
import jax.numpy as jnp
from jax.experimental import pallas as pl
from jax.experimental.pallas import tpu as pltpu

# --- MarginLoss default hyperparameters (from __init__) -----------------------
BETA_INIT = 1.2      # trainable, non-class-specific beta -> shape (1,)
MARGIN = 0.2
NU = 0.1
EPS = 1e-8

_DEFAULT_SCOPED_VMEM_BYTES = 32 * 1024 * 1024
_TILE_WORK_BUDGET_BYTES = 4 * 1024 * 1024      # per-tile live intermediates


def _round_up(x, m):
    return (int(x) + m - 1) // m * m


def _default_num_splits():
    """2 splits only where there are two TensorCores to shard onto (v7x)."""
    try:
        kind = jax.devices()[0].device_kind.lower()
    except Exception:
        return 1
    return 2 if ("v7" in kind or "tpu7" in kind) else 1


# --- Pallas kernel -------------------------------------------------------------
def _make_margin_loss_kernel(t_tile, b_pad, t_valid, tiles_per_split, margin):
    """Margin-loss tile kernel with MXU selector-matmul gather."""

    def kernel(a_ref, p_ref, n_ref,          # (1, t_tile, 1) int32 index tiles
               beta_ref,                      # (1,) f32 in SMEM
               feat_ref,                      # (b_pad, d_pad) staged in VMEM
               out_ref):                      # (1, 2, 8, 128) packed [tot, cnt]
        c = pl.program_id(0)                  # core-split axis ("parallel")
        i = pl.program_id(1)                  # tile axis within split ("arbitrary")
        tile = c * tiles_per_split + i        # global tile index

        @pl.when(i == 0)
        def _():
            out_ref[...] = jnp.zeros(out_ref.shape, out_ref.dtype)

        feat = feat_ref[...]                  # resident: fetched once per split
        a_col = a_ref[0]                      # (t_tile, 1) int32
        p_col = p_ref[0]
        n_col = n_ref[0]

        # Gather-as-matmul: selector rows with +1 at pos/neg row index and -1 at
        # the anchor row index.  One MXU matmul per pair produces
        # (pos - anc) / (neg - anc) directly in f32 — gather, subtraction and
        # upcast fused; padded feature rows are never selected (indices < B).
        col = jax.lax.broadcasted_iota(jnp.int32, (t_tile, b_pad), 1)
        oh_a = jnp.where(col == a_col, 1.0, 0.0)
        sel_ap = (jnp.where(col == p_col, 1.0, 0.0) - oh_a).astype(feat.dtype)
        sel_an = (jnp.where(col == n_col, 1.0, 0.0) - oh_a).astype(feat.dtype)

        diff_ap = jnp.dot(sel_ap, feat, preferred_element_type=jnp.float32)
        diff_an = jnp.dot(sel_an, feat, preferred_element_type=jnp.float32)

        d_ap = jnp.sqrt(jnp.sum(diff_ap * diff_ap, axis=1, keepdims=True) + EPS)
        d_an = jnp.sqrt(jnp.sum(diff_an * diff_an, axis=1, keepdims=True) + EPS)

        beta = beta_ref[0]
        pos_loss = jnp.maximum(d_ap - beta + margin, 0.0)
        neg_loss = jnp.maximum(beta - d_an + margin, 0.0)

        # Mask padded triplet rows out of both the sum and the pair count.
        row_id = tile * t_tile + jax.lax.broadcasted_iota(
            jnp.int32, (t_tile, 1), 0)
        valid = (row_id < t_valid).astype(jnp.float32)

        tile_tot = jnp.sum(valid * (pos_loss + neg_loss))
        tile_cnt = jnp.sum(
            valid * jnp.logical_or(pos_loss > 0.0, neg_loss > 0.0)
            .astype(jnp.float32))

        out_ref[0, 0] = out_ref[0, 0] + tile_tot
        out_ref[0, 1] = out_ref[0, 1] + tile_cnt

    return kernel


def margin_loss_pallas(feature, anchor_idx, pos_idx, neg_idx, beta,
                       *, t_tile=None, num_splits=None,
                       margin=MARGIN, nu=NU, stream_dtype=jnp.float32):
    """Fused gather + margin-loss reduction.

    The whole (padded) feature matrix is staged in VMEM once by the Pallas
    pipeline; per-tile triplet rows are gathered on the MXU via ±1 selector
    matmuls, so there are no per-row DMAs or semaphore waits in the hot loop.
    """
    feature = jnp.asarray(feature)
    B, D = feature.shape
    anchor_idx = np.asarray(anchor_idx, np.int32)
    pos_idx = np.asarray(pos_idx, np.int32)
    neg_idx = np.asarray(neg_idx, np.int32)
    beta = jnp.asarray(beta, jnp.float32).reshape(-1)
    # TODO(synk): class_specific_beta would require gathering beta per anchor
    # class inside the kernel; only the non-class-specific (1,) beta is handled.

    T = int(anchor_idx.shape[0])
    if T == 0:
        # No mined triplets: sum over empty set is 0, pair_cnt == 0 -> loss = 0.
        return jnp.asarray(0.0, jnp.float32)

    if num_splits is None:
        num_splits = _default_num_splits()

    # Lane-dense padding: D to a multiple of 128 (zero lanes are neutral for the
    # squared distances), B to a multiple of 128 so the selector matmul's
    # contracting dimension is MXU-native (padded rows are never selected).
    D_pad = _round_up(D, 128)
    B_pad = _round_up(max(B, 8), 128)
    if (B_pad, D_pad) != (B, D):
        feature = jnp.pad(feature, ((0, B_pad - B), (0, D_pad - D)))
    feature = feature.astype(stream_dtype)
    itemsize = np.dtype(stream_dtype).itemsize

    # Tile sizing: per-tile live intermediates are 2 selector matrices
    # (t_tile, B_pad) plus 2 difference matrices (t_tile, D_pad) in f32.
    per_row_bytes = 2 * B_pad * (4 + itemsize) + 2 * D_pad * 4 + 16
    if t_tile is None:
        t_tile = _TILE_WORK_BUDGET_BYTES // per_row_bytes
    t_tile = int(max(16, min(1024, int(t_tile))))
    t_tile = _round_up(t_tile, 16)
    t_tile = min(t_tile, _round_up(T, 16))        # don't over-tile tiny problems

    num_tiles = pl.cdiv(T, t_tile)
    num_splits = max(1, min(int(num_splits), num_tiles))
    tiles_per_split = pl.cdiv(num_tiles, num_splits)
    total_tiles = num_splits * tiles_per_split
    T_pad = total_tiles * t_tile

    def pad_idx(idx):
        out = np.zeros((T_pad,), np.int32)        # pad with row 0; masked in-kernel
        out[:T] = idx
        return jnp.asarray(out.reshape(total_tiles, t_tile, 1))

    a_idx = pad_idx(anchor_idx)
    p_idx = pad_idx(pos_idx)
    n_idx = pad_idx(neg_idx)

    kernel = _make_margin_loss_kernel(t_tile, B_pad, T, tiles_per_split,
                                      float(margin))

    idx_spec = pl.BlockSpec((1, t_tile, 1),
                            lambda c, i: (c * tiles_per_split + i, 0, 0))
    grid_spec = pltpu.PrefetchScalarGridSpec(
        num_scalar_prefetch=0,
        grid=(num_splits, tiles_per_split),
        in_specs=[
            idx_spec, idx_spec, idx_spec,                         # a / p / n indices
            pl.BlockSpec(memory_space=pltpu.MemorySpace.SMEM),    # beta (1,)
            pl.BlockSpec((B_pad, D_pad), lambda c, i: (0, 0)),    # staged feature
        ],
        out_specs=pl.BlockSpec((1, 2, 8, 128), lambda c, i: (c, 0, 0, 0)),
    )

    # VMEM budget: staged feature is double-buffered by the pipeline even though
    # its block index never changes; raise the scoped-VMEM limit only if needed
    # (keep the 32 MiB default otherwise; v7x only has 64 MiB physical).
    vmem_est = (2 * B_pad * D_pad * itemsize          # feature (2 pipeline buffers)
                + 3 * 2 * t_tile * 128 * 4            # index tiles (lane-padded)
                + 2 * t_tile * per_row_bytes          # live intermediates + slack
                + 2 * 2 * 2 * 8 * 128 * 4             # packed output blocks
                + (2 << 20))                          # headroom
    vmem_limit = (int(min(vmem_est, 128 * 1024 * 1024))
                  if vmem_est > _DEFAULT_SCOPED_VMEM_BYTES else None)
    # TODO(synk): if the staged feature itself exceeds the per-generation VMEM
    # budget, fall back to streaming feature tiles from HBM (not needed for
    # typical metric-learning batches).

    partial = pl.pallas_call(
        kernel,
        out_shape=jax.ShapeDtypeStruct((num_splits, 2, 8, 128), jnp.float32),
        grid_spec=grid_spec,
        compiler_params=pltpu.CompilerParams(
            dimension_semantics=("parallel", "arbitrary"),
            vmem_limit_bytes=vmem_limit),
    )(a_idx, p_idx, n_idx, beta, feature)

    # Tiny scalar epilogue in the wrapper: combine per-split partials,
    # beta L1 regularization, and a guarded divide (no 0/0).
    total = partial[:, 0, 0, 0].sum()
    pair_cnt = partial[:, 1, 0, 0].sum()
    beta_reg = jnp.sum(jnp.abs(beta)) * nu
    loss = jnp.where(pair_cnt > 0.0,
                     (total + beta_reg) / jnp.maximum(pair_cnt, 1.0),
                     total)
    return loss


# --- Simple deterministic batchminner (glue) -----------------------------------
def simple_batchminner(labels):
    """For each sample with at least one same-class and one other-class sample,
    emit one (anchor, positive, negative) triplet deterministically."""
    labels = np.asarray(labels)
    B = labels.shape[0]
    a_idx, p_idx, n_idx = [], [], []
    for i in range(B):
        same = np.where((labels == labels[i]) & (np.arange(B) != i))[0]
        diff = np.where(labels != labels[i])[0]
        if same.size == 0 or diff.size == 0:
            continue
        a_idx.append(i)
        p_idx.append(int(same[0]))
        n_idx.append(int(diff[i % diff.size]))
    return (np.array(a_idx, np.int32),
            np.array(p_idx, np.int32),
            np.array(n_idx, np.int32))


# --- Pure-JAX reference for verification ---------------------------------------
def margin_loss_ref(feature, anchor_idx, pos_idx, neg_idx, beta):
    anc, pos, neg = feature[anchor_idx], feature[pos_idx], feature[neg_idx]
    d_ap = jnp.sqrt(((pos - anc) ** 2).sum(1) + EPS)
    d_an = jnp.sqrt(((neg - anc) ** 2).sum(1) + EPS)
    pos_loss = jax.nn.relu(d_ap - beta[0] + MARGIN)
    neg_loss = jax.nn.relu(beta[0] - d_an + MARGIN)
    pair_cnt = jnp.sum(((pos_loss > 0) | (neg_loss > 0)).astype(jnp.float32))
    loss = jnp.sum(pos_loss + neg_loss)
    reg = jnp.sum(jnp.abs(beta)) * NU
    return jnp.where(pair_cnt > 0, (loss + reg) / pair_cnt, loss)


if __name__ == "__main__":
    # Small but non-trivial: D=96 exercises lane padding to 128; B=32 exercises
    # batch padding to 128; labels include two singleton classes so two samples
    # mine no positive (exercises masking).
    B, D = 32, 96
    key = jax.random.PRNGKey(0)
    feature = jax.random.normal(key, (B, D), dtype=jnp.float32)
    labels = np.array([0] * 15 + [1] * 15 + [2] + [3], dtype=np.int32)

    # Deterministic parameter init (trainable, non-class-specific beta).
    beta = jnp.array([BETA_INIT], dtype=jnp.float32)

    anchor_idx, pos_idx, neg_idx = simple_batchminner(labels)   # T = 30 triplets

    ref = margin_loss_ref(feature, anchor_idx, pos_idx, neg_idx, beta)

    # Config 1: defaults (single tile, auto num_splits).
    loss1 = margin_loss_pallas(feature, anchor_idx, pos_idx, neg_idx, beta)
    loss1 = jax.block_until_ready(loss1)

    # Config 2: forced multi-tile + core-split path (exercises padding/masking,
    # the "parallel" split axis and per-split accumulation).
    loss2 = margin_loss_pallas(feature, anchor_idx, pos_idx, neg_idx, beta,
                               t_tile=16, num_splits=2)
    loss2 = jax.block_until_ready(loss2)

    # The selector matmul may route f32 features through reduced-precision MXU
    # passes on some generations, so allow ~1e-2 slack vs. the exact reference.
    np.testing.assert_allclose(np.asarray(loss1), np.asarray(ref),
                               rtol=1e-2, atol=1e-2)
    np.testing.assert_allclose(np.asarray(loss2), np.asarray(ref),
                               rtol=1e-2, atol=1e-2)

    print("KERNEL_OK")
</pallas_src>

<mosaic_0001>
module attributes {stable_mosaic.version = 11 : i64} {
  func.func @kernel(%arg0: i32, %arg1: i32, %arg2: memref<1x32x1xi32, #tpu.memory_space<vmem>>, %arg3: memref<1x32x1xi32, #tpu.memory_space<vmem>>, %arg4: memref<1x32x1xi32, #tpu.memory_space<vmem>>, %arg5: memref<1xf32, #tpu.memory_space<smem>>, %arg6: memref<128x128xf32, #tpu.memory_space<vmem>>, %arg7: memref<1x2x8x128xf32, #tpu.memory_space<vmem>>) attributes {dimension_semantics = [#tpu.dimension_semantics<parallel>, #tpu.dimension_semantics<arbitrary>], iteration_bounds = array<i64: 1, 1>, scalar_prefetch = 0 : i64, scratch_operands = 0 : i64, tpu.core_type = #tpu.core_type<tc>, window_params = [{transform_indices = @transform_0, window_bounds = array<i64: 1, 32, 1>}, {transform_indices = @transform_1, window_bounds = array<i64: 1, 32, 1>}, {transform_indices = @transform_2, window_bounds = array<i64: 1, 32, 1>}, {transform_indices = @transform_3, window_bounds = array<i64: 1>}, {pipeline_mode = #tpu.pipeline_mode<synchronous>, transform_indices = @transform_4, window_bounds = array<i64: 128, 128>}, {transform_indices = @transform_5, window_bounds = array<i64: 1, 2, 8, 128>}]} {
    %c1_i32 = arith.constant 1 : i32
    %0 = arith.muli %arg0, %c1_i32 : i32
    %1 = arith.addi %0, %arg1 : i32
    %c0_i32 = arith.constant 0 : i32
    %2 = arith.cmpi eq, %arg1, %c0_i32 : i32
    %3 = arith.extui %2 : i1 to i32
    %c0_i32_0 = arith.constant 0 : i32
    %4 = arith.cmpi ne, %3, %c0_i32_0 : i32
    scf.if %4 {
      %cst_46 = arith.constant 0.000000e+00 : f32
      %97 = vector.broadcast %cst_46 : f32 to vector<1x2x8x128xf32>
      %c0_47 = arith.constant 0 : index
      %c0_48 = arith.constant 0 : index
      %c0_49 = arith.constant 0 : index
      %c0_50 = arith.constant 0 : index
      %98 = vector.load %arg7[%c0_47, %c0_48, %c0_49, %c0_50] : memref<1x2x8x128xf32, #tpu.memory_space<vmem>>, vector<1x2x8x128xf32>
      tpu.vector_store %arg7[%c0_47, %c0_48, %c0_49, %c0_50], %97 {strides = array<i32>} : memref<1x2x8x128xf32, #tpu.memory_space<vmem>>, vector<1x2x8x128xf32>,
    } else {
    }
    %c0 = arith.constant 0 : index
    %c0_1 = arith.constant 0 : index
    %5 = vector.load %arg6[%c0, %c0_1] : memref<128x128xf32, #tpu.memory_space<vmem>>, vector<128x128xf32>
    %c0_2 = arith.constant 0 : index
    %c0_3 = arith.constant 0 : index
    %c0_4 = arith.constant 0 : index
    %6 = vector.load %arg2[%c0_2, %c0_3, %c0_4] : memref<1x32x1xi32, #tpu.memory_space<vmem>>, vector<1x32x1xi32>
    %7 = vector.shape_cast %6 : vector<1x32x1xi32> to vector<32x1xi32>
    %c0_5 = arith.constant 0 : index
    %c0_6 = arith.constant 0 : index
    %c0_7 = arith.constant 0 : index
    %8 = vector.load %arg3[%c0_5, %c0_6, %c0_7] : memref<1x32x1xi32, #tpu.memory_space<vmem>>, vector<1x32x1xi32>
    %9 = vector.shape_cast %8 : vector<1x32x1xi32> to vector<32x1xi32>
    %c0_8 = arith.constant 0 : index
    %c0_9 = arith.constant 0 : index
    %c0_10 = arith.constant 0 : index
    %10 = vector.load %arg4[%c0_8, %c0_9, %c0_10] : memref<1x32x1xi32, #tpu.memory_space<vmem>>, vector<1x32x1xi32>
    %11 = vector.shape_cast %10 : vector<1x32x1xi32> to vector<32x1xi32>
    %12 = tpu.iota {dimensions = array<i32: 1>} : vector<32x128xi32>
    %13 = vector.broadcast %7 : vector<32x1xi32> to vector<32x128xi32>
    %14 = arith.cmpi eq, %12, %13 : vector<32x128xi32>
    %cst = arith.constant 1.000000e+00 : f32
    %cst_11 = arith.constant 0.000000e+00 : f32
    %15 = vector.broadcast %cst : f32 to vector<32x128xf32>
    %16 = vector.broadcast %cst_11 : f32 to vector<32x128xf32>
    %17 = arith.select %14, %15, %16 : vector<32x128xi1>, vector<32x128xf32>
    %18 = vector.broadcast %9 : vector<32x1xi32> to vector<32x128xi32>
    %19 = arith.cmpi eq, %12, %18 : vector<32x128xi32>
    %cst_12 = arith.constant 1.000000e+00 : f32
    %cst_13 = arith.constant 0.000000e+00 : f32
    %20 = vector.broadcast %cst_12 : f32 to vector<32x128xf32>
    %21 = vector.broadcast %cst_13 : f32 to vector<32x128xf32>
    %22 = arith.select %19, %20, %21 : vector<32x128xi1>, vector<32x128xf32>
    %23 = arith.subf %22, %17 : vector<32x128xf32>
    %24 = vector.broadcast %11 : vector<32x1xi32> to vector<32x128xi32>
    %25 = arith.cmpi eq, %12, %24 : vector<32x128xi32>
    %cst_14 = arith.constant 1.000000e+00 : f32
    %cst_15 = arith.constant 0.000000e+00 : f32
    %26 = vector.broadcast %cst_14 : f32 to vector<32x128xf32>
    %27 = vector.broadcast %cst_15 : f32 to vector<32x128xf32>
    %28 = arith.select %25, %26, %27 : vector<32x128xi1>, vector<32x128xf32>
    %29 = arith.subf %28, %17 : vector<32x128xf32>
    %cst_16 = arith.constant dense<0.000000e+00> : vector<32x128xf32>
    %30 = tpu.matmul %23, %5, %cst_16 {dimension_numbers = #tpu.dot_dimension_numbers<[1], [0], [0], [1], [0, 0, 1, 1], [], []>} : vector<32x128xf32>, vector<128x128xf32>, vector<32x128xf32> -> vector<32x128xf32>
    %cst_17 = arith.constant dense<0.000000e+00> : vector<32x128xf32>
    %31 = tpu.matmul %29, %5, %cst_17 {dimension_numbers = #tpu.dot_dimension_numbers<[1], [0], [0], [1], [0, 0, 1, 1], [], []>} : vector<32x128xf32>, vector<128x128xf32>, vector<32x128xf32> -> vector<32x128xf32>
    %32 = arith.mulf %30, %30 : vector<32x128xf32>
    %cst_18 = arith.constant dense<0.000000e+00> : vector<32xf32>
    %33 = vector.multi_reduction <add>, %32, %cst_18 [1] : vector<32x128xf32> to vector<32xf32>
    %34 = vector.shape_cast %33 : vector<32xf32> to vector<32x1xf32>
    %cst_19 = arith.constant 9.99999993E-9 : f32
    %35 = vector.broadcast %cst_19 : f32 to vector<32x1xf32>
    %36 = arith.addf %34, %35 : vector<32x1xf32>
    %37 = math.sqrt %36 : vector<32x1xf32>
    %38 = arith.mulf %31, %31 : vector<32x128xf32>
    %cst_20 = arith.constant dense<0.000000e+00> : vector<32xf32>
    %39 = vector.multi_reduction <add>, %38, %cst_20 [1] : vector<32x128xf32> to vector<32xf32>
    %40 = vector.shape_cast %39 : vector<32xf32> to vector<32x1xf32>
    %cst_21 = arith.constant 9.99999993E-9 : f32
    %41 = vector.broadcast %cst_21 : f32 to vector<32x1xf32>
    %42 = arith.addf %40, %41 : vector<32x1xf32>
    %43 = math.sqrt %42 : vector<32x1xf32>
    %c0_22 = arith.constant 0 : index
    %44 = memref.load %arg5[%c0_22] : memref<1xf32, #tpu.memory_space<smem>>
    %45 = vector.broadcast %44 : f32 to vector<32x1xf32>
    %46 = arith.subf %37, %45 : vector<32x1xf32>
    %cst_23 = arith.constant 2.000000e-01 : f32
    %47 = vector.broadcast %cst_23 : f32 to vector<32x1xf32>
    %48 = arith.addf %46, %47 : vector<32x1xf32>
    %cst_24 = arith.constant 0.000000e+00 : f32
    %49 = vector.broadcast %cst_24 : f32 to vector<32x1xf32>
    %50 = arith.maximumf %48, %49 : vector<32x1xf32>
    %51 = vector.broadcast %44 : f32 to vector<32x1xf32>
    %52 = arith.subf %51, %43 : vector<32x1xf32>
    %cst_25 = arith.constant 2.000000e-01 : f32
    %53 = vector.broadcast %cst_25 : f32 to vector<32x1xf32>
    %54 = arith.addf %52, %53 : vector<32x1xf32>
    %cst_26 = arith.constant 0.000000e+00 : f32
    %55 = vector.broadcast %cst_26 : f32 to vector<32x1xf32>
    %56 = arith.maximumf %54, %55 : vector<32x1xf32>
    %c32_i32 = arith.constant 32 : i32
    %57 = arith.muli %1, %c32_i32 : i32
    %58 = tpu.iota {dimensions = array<i32: 0>} : vector<32x1xi32>
    %59 = vector.broadcast %57 : i32 to vector<32x1xi32>
    %60 = arith.addi %59, %58 : vector<32x1xi32>
    %c30_i32 = arith.constant 30 : i32
    %61 = vector.broadcast %c30_i32 : i32 to vector<32x1xi32>
    %62 = arith.cmpi slt, %60, %61 : vector<32x1xi32>
    %63 = arith.extui %62 : vector<32x1xi1> to vector<32x1xi32>
    %64 = arith.sitofp %63 : vector<32x1xi32> to vector<32x1xf32>
    %65 = arith.addf %50, %56 : vector<32x1xf32>
    %66 = arith.mulf %64, %65 : vector<32x1xf32>
    %67 = vector.shape_cast %66 : vector<32x1xf32> to vector<1x32x1xf32>
    %cst_27 = arith.constant dense<0.000000e+00> : vector<1xf32>
    %68 = vector.multi_reduction <add>, %67, %cst_27 [1, 2] : vector<1x32x1xf32> to vector<1xf32>
    %69 = vector.shape_cast %68 : vector<1xf32> to vector<1x1x1xf32>
    %70 = vector.extract %69[0, 0, 0] : f32 from vector<1x1x1xf32>
    %cst_28 = arith.constant 0.000000e+00 : f32
    %71 = vector.broadcast %cst_28 : f32 to vector<32x1xf32>
    %72 = arith.cmpf ogt, %50, %71 : vector<32x1xf32>
    %cst_29 = arith.constant 0.000000e+00 : f32
    %73 = vector.broadcast %cst_29 : f32 to vector<32x1xf32>
    %74 = arith.cmpf ogt, %56, %73 : vector<32x1xf32>
    %75 = arith.ori %72, %74 : vector<32x1xi1>
    %76 = arith.extui %75 : vector<32x1xi1> to vector<32x1xi32>
    %77 = arith.sitofp %76 : vector<32x1xi32> to vector<32x1xf32>
    %78 = arith.mulf %64, %77 : vector<32x1xf32>
    %79 = vector.shape_cast %78 : vector<32x1xf32> to vector<1x32x1xf32>
    %cst_30 = arith.constant dense<0.000000e+00> : vector<1xf32>
    %80 = vector.multi_reduction <add>, %79, %cst_30 [1, 2] : vector<1x32x1xf32> to vector<1xf32>
    %81 = vector.shape_cast %80 : vector<1xf32> to vector<1x1x1xf32>
    %82 = vector.extract %81[0, 0, 0] : f32 from vector<1x1x1xf32>
    %c0_31 = arith.constant 0 : index
    %c0_32 = arith.constant 0 : index
    %c0_33 = arith.constant 0 : index
    %c0_34 = arith.constant 0 : index
    %83 = vector.load %arg7[%c0_31, %c0_32, %c0_33, %c0_34] : memref<1x2x8x128xf32, #tpu.memory_space<vmem>>, vector<1x1x8x128xf32>
    %84 = vector.shape_cast %83 : vector<1x1x8x128xf32> to vector<8x128xf32>
    %85 = vector.broadcast %70 : f32 to vector<8x128xf32>
    %86 = arith.addf %84, %85 : vector<8x128xf32>
    %c0_35 = arith.constant 0 : index
    %c0_36 = arith.constant 0 : index
    %c0_37 = arith.constant 0 : index
    %c0_38 = arith.constant 0 : index
    %87 = vector.load %arg7[%c0_35, %c0_36, %c0_37, %c0_38] : memref<1x2x8x128xf32, #tpu.memory_space<vmem>>, vector<1x1x8x128xf32>
    %88 = vector.shape_cast %87 : vector<1x1x8x128xf32> to vector<8x128xf32>
    %89 = vector.shape_cast %86 : vector<8x128xf32> to vector<1x1x8x128xf32>
    tpu.vector_store %arg7[%c0_35, %c0_36, %c0_37, %c0_38], %89 {strides = array<i32>} : memref<1x2x8x128xf32, #tpu.memory_space<vmem>>, vector<1x1x8x128xf32>,
    %c0_39 = arith.constant 0 : index
    %c1 = arith.constant 1 : index
    %c0_40 = arith.constant 0 : index
    %c0_41 = arith.constant 0 : index
    %90 = vector.load %arg7[%c0_39, %c1, %c0_40, %c0_41] : memref<1x2x8x128xf32, #tpu.memory_space<vmem>>, vector<1x1x8x128xf32>
    %91 = vector.shape_cast %90 : vector<1x1x8x128xf32> to vector<8x128xf32>
    %92 = vector.broadcast %82 : f32 to vector<8x128xf32>
    %93 = arith.addf %91, %92 : vector<8x128xf32>
    %c0_42 = arith.constant 0 : index
    %c1_43 = arith.constant 1 : index
    %c0_44 = arith.constant 0 : index
    %c0_45 = arith.constant 0 : index
    %94 = vector.load %arg7[%c0_42, %c1_43, %c0_44, %c0_45] : memref<1x2x8x128xf32, #tpu.memory_space<vmem>>, vector<1x1x8x128xf32>
    %95 = vector.shape_cast %94 : vector<1x1x8x128xf32> to vector<8x128xf32>
    %96 = vector.shape_cast %93 : vector<8x128xf32> to vector<1x1x8x128xf32>
    tpu.vector_store %arg7[%c0_42, %c1_43, %c0_44, %c0_45], %96 {strides = array<i32>} : memref<1x2x8x128xf32, #tpu.memory_space<vmem>>, vector<1x1x8x128xf32>,
    return
  }
  func.func @transform_0(%arg0: i32, %arg1: i32) -> (i32, i32, i32) {
    %c1_i32 = arith.constant 1 : i32
    %0 = arith.muli %arg0, %c1_i32 : i32
    %1 = arith.addi %0, %arg1 : i32
    %c0_i32 = arith.constant 0 : i32
    %c0_i32_0 = arith.constant 0 : i32
    %c0_i32_1 = arith.constant 0 : i32
    return %1, %c0_i32, %c0_i32_0 : i32, i32, i32
  }
  func.func @transform_1(%arg0: i32, %arg1: i32) -> (i32, i32, i32) {
    %c1_i32 = arith.constant 1 : i32
    %0 = arith.muli %arg0, %c1_i32 : i32
    %1 = arith.addi %0, %arg1 : i32
    %c0_i32 = arith.constant 0 : i32
    %c0_i32_0 = arith.constant 0 : i32
    %c0_i32_1 = arith.constant 0 : i32
    return %1, %c0_i32, %c0_i32_0 : i32, i32, i32
  }
  func.func @transform_2(%arg0: i32, %arg1: i32) -> (i32, i32, i32) {
    %c1_i32 = arith.constant 1 : i32
    %0 = arith.muli %arg0, %c1_i32 : i32
    %1 = arith.addi %0, %arg1 : i32
    %c0_i32 = arith.constant 0 : i32
    %c0_i32_0 = arith.constant 0 : i32
    %c0_i32_1 = arith.constant 0 : i32
    return %1, %c0_i32, %c0_i32_0 : i32, i32, i32
  }
  func.func @transform_3(%arg0: i32, %arg1: i32) -> i32 {
    %c0_i32 = arith.constant 0 : i32
    %c0_i32_0 = arith.constant 0 : i32
    return %c0_i32 : i32
  }
  func.func @transform_4(%arg0: i32, %arg1: i32) -> (i32, i32) {
    %c0_i32 = arith.constant 0 : i32
    %c0_i32_0 = arith.constant 0 : i32
    %c0_i32_1 = arith.constant 0 : i32
    return %c0_i32, %c0_i32_0 : i32, i32
  }
  func.func @transform_5(%arg0: i32, %arg1: i32) -> (i32, i32, i32, i32) {
    %c0_i32 = arith.constant 0 : i32
    %c0_i32_0 = arith.constant 0 : i32
    %c0_i32_1 = arith.constant 0 : i32
    %c0_i32_2 = arith.constant 0 : i32
    return %arg0, %c0_i32, %c0_i32_0, %c0_i32_1 : i32, i32, i32, i32
  }
}

</mosaic_0001>

<llo_original>
// kernel: tpu_custom_call.1
$region0: #{tpu_custom_call.1}
  #allocation0 [shape = 'u32[]', space=smem, size = 0x4, offset = 0x4, fixed_abs, tag = 'smem constant byte address 0x4 - core index']
  #allocation1 [shape = 'u32[144,128]{1,0:T(1,128)}', space=vmem, size = 0x12000, scoped, tag = 'internal scratch']
  #allocation2 [shape = 'f32[1]{0:T(128)S(6)}', space=smem, size = 0x200, scoped, tag = 'scoped memory for tpu_custom_call.1']
  %s0 = inlined_call_operand.vmem [shape: s32[1,32,1], index: 0, kind: input, shape index: {}]
  %s1 = inlined_call_operand.vmem [shape: s32[1,32,1], index: 1, kind: input, shape index: {}]
  %s2 = inlined_call_operand.vmem [shape: s32[1,32,1], index: 2, kind: input, shape index: {}]
  %s3 = inlined_call_operand.<no memory space> [shape: f32[1], index: 3, kind: input, shape index: {}]
  %s4 = inlined_call_operand.hbm [shape: f32[128,128], index: 4, kind: input, shape index: {}]
  %s5 = inlined_call_operand.hbm [shape: f32[1,2,8,128], index: 5, kind: output, shape index: {}]
  %s6 = sld [smem:[#allocation0]]
  $region38: #{tpu_custom_call.1} parent=0
    _
  %s8 = ssub.s32 1, %s6
  %s9 = scalar_select 0, %s8, %s6
  %10 = sst [smem:[#allocation2]] %s3
  $region1: #{tpu_custom_call.1} parent=0
    #allocation3 [shape = 'u8[65536]{0}', space=vmem, size = 0x10000, scoped, tag = 'input window, operand 4, single buffered']
    #allocation4 [shape = 's32[1]{0}', space=sflag, size = 0x4, scoped, tag = 'scoped memory for tpu_custom_call.1']
    #allocation5 [shape = 's32[1]{0}', space=sflag, size = 0x4, scoped, tag = 'scoped memory for tpu_custom_call.1']
    #allocation6 [shape = 'u8[8192]{0}', space=vmem, size = 0x2000, scoped, tag = 'output window, operand 0, single buffered']
    %11 = vsyncpa [#allocation4], 0
    %12 = vsyncpa [#allocation5], 0
    // Predicated region
    $region2: #{tpu_custom_call.1} parent=1 // pred_check
      _
    $region3: #{tpu_custom_call.1} parent=1 // pred_check_branch
      %14 = sbr.rel (0) target = $region5
    $region4: #{tpu_custom_call.1} parent=1 // pred_region
      %s15 = sadd.s32 0, 0
      %p16 = scmp.lt.s32.totalorder %s15, 0
      %s17 = scalar_select %p16, %s15, 0
      %s18 = smul.addr %s17, 4
      %s19 = smul.addr %s18, 8
      %s20 = scalar_lea.vmem %s0, %s19
      %s21 = sadd.s32 0, 0
    $region5: #{tpu_custom_call.1} parent=1 // pred_fallthru
      _
    // Predicated region
    $region6: #{tpu_custom_call.1} parent=1 // pred_check
      _
    $region7: #{tpu_custom_call.1} parent=1 // pred_check_branch
      %23 = sbr.rel (0) target = $region9
    $region8: #{tpu_custom_call.1} parent=1 // pred_region
      %s24 = sadd.s32 0, 0
      %p25 = scmp.lt.s32.totalorder %s24, 0
      %s26 = scalar_select %p25, %s24, 0
      %s27 = smul.addr %s26, 4
      %s28 = smul.addr %s27, 8
      %s29 = scalar_lea.vmem %s1, %s28
      %s30 = sadd.s32 0, 0
    $region9: #{tpu_custom_call.1} parent=1 // pred_fallthru
      _
    // Predicated region
    $region10: #{tpu_custom_call.1} parent=1 // pred_check
      _
    $region11: #{tpu_custom_call.1} parent=1 // pred_check_branch
      %32 = sbr.rel (0) target = $region13
    $region12: #{tpu_custom_call.1} parent=1 // pred_region
      %s33 = sadd.s32 0, 0
      %p34 = scmp.lt.s32.totalorder %s33, 0
      %s35 = scalar_select %p34, %s33, 0
      %s36 = smul.addr %s35, 4
      %s37 = smul.addr %s36, 8
      %s38 = scalar_lea.vmem %s2, %s37
      %s39 = sadd.s32 0, 0
    $region13: #{tpu_custom_call.1} parent=1 // pred_fallthru
      _
    // Predicated region
    $region14: #{tpu_custom_call.1} parent=1 // pred_check
      _
    $region15: #{tpu_custom_call.1} parent=1 // pred_check_branch
      %41 = sbr.rel (0) target = $region17
    $region16: #{tpu_custom_call.1} parent=1 // pred_region
      _
    $region17: #{tpu_custom_call.1} parent=1 // pred_fallthru
      _
    // Predicated region
    $region18: #{tpu_custom_call.1} parent=1 // pred_check
      _
    $region19: #{tpu_custom_call.1} parent=1 // pred_check_branch
      %43 = sbr.rel (0) target = $region21
    $region20: #{tpu_custom_call.1} parent=1 // pred_region
      %s45 = ssub.s32 2048, 2048
      %46 = vsyncadd [#allocation4], %s45
      %s47 = sshll.u32 [#allocation3], 4
      %s48 = int_to_ptr.vmem [resolvable:$true] %s47
      %53 = dma.hbm_to_vmem [thread:$0]  %s4, 2048, %s48, [#allocation4], 128, 128, 8
    $region21: #{tpu_custom_call.1} parent=1 // pred_fallthru
      _
    // Predicated region
    $region22: #{tpu_custom_call.1} parent=1 // pred_check
      _
    $region23: #{tpu_custom_call.1} parent=1 // pred_check_branch
      %55 = sbr.rel (0) target = $region25
    $region24: #{tpu_custom_call.1} parent=1 // pred_region
      %56 = dma.done [#allocation4], 2048
    $region25: #{tpu_custom_call.1} parent=1 // pred_fallthru
      _
    %s57 = sadd.s32 0, 0
    %p58 = scmp.lt.s32.totalorder %s57, 0
    %s59 = scalar_select %p58, %s57, 0
    %s60 = smul.addr %s59, 4
    %s61 = smul.addr %s60, 8
    %s62 = scalar_lea.vmem %s0, %s61
    %s63 = sadd.s32 0, 0
    %p64 = scmp.lt.s32.totalorder %s63, 0
    %s65 = scalar_select %p64, %s63, 0
    %s66 = smul.addr %s65, 4
    %s67 = smul.addr %s66, 8
    %s68 = scalar_lea.vmem %s1, %s67
    %s69 = sadd.s32 0, 0
    %p70 = scmp.lt.s32.totalorder %s69, 0
    %s71 = scalar_select %p70, %s69, 0
    %s72 = smul.addr %s71, 4
    %s73 = smul.addr %s72, 8
    %s74 = scalar_lea.vmem %s2, %s73
    %s75 = sadd.s32 0, 0
    %p76 = scmp.lt.s32.totalorder %s75, 0
    %s77 = scalar_select %p76, %s75, 0
    %s78 = smul.addr %s77, 4
    %s79 = smul.addr %s78, 8
    %s80 = scalar_lea.vmem %s0, %s79
    %s81 = sadd.s32 0, 0
    %s82 = sadd.s32 0, 0
    %p83 = scmp.lt.s32.totalorder %s82, 0
    %s84 = scalar_select %p83, %s82, 0
    %s85 = smul.addr %s84, 4
    %s86 = smul.addr %s85, 8
    %s87 = scalar_lea.vmem %s1, %s86
    %s88 = sadd.s32 0, 0
    %s89 = sadd.s32 0, 0
    %p90 = scmp.lt.s32.totalorder %s89, 0
    %s91 = scalar_select %p90, %s89, 0
    %s92 = smul.addr %s91, 4
    %s93 = smul.addr %s92, 8
    %s94 = scalar_lea.vmem %s2, %s93
    %s95 = sadd.s32 0, 0
    %s96 = sadd.s32 0, 0
    %p97 = scmp.eq.s32.totalorder 0, 0
    // Predicated region
    $region26: #{tpu_custom_call.1} parent=1 // pred_check
      %p98 = pneg %p97
    $region27: #{tpu_custom_call.1} parent=1 // pred_check_branch
      %100 = sbr.rel (%p98) target = $region29
    $region28: #{tpu_custom_call.1} parent=1 // pred_region
      %101 = vst [vmem:[#allocation6] sm:$0xff] 0.0
      %102 = vst [vmem:[#allocation6 + $0x8] sm:$0xff] 0.0
    $region29: #{tpu_custom_call.1} parent=1 // pred_fallthru
      _
    %v103 = vld [vmem:[#allocation3] sm:$0xff]
    %v104 = vld [vmem:[#allocation3 + $0x8] sm:$0xff]
    %v105 = vld [vmem:[#allocation3 + $0x10] sm:$0xff]
    %v106 = vld [vmem:[#allocation3 + $0x18] sm:$0xff]
    %v107 = vld [vmem:[#allocation3 + $0x20] sm:$0xff]
    %v108 = vld [vmem:[#allocation3 + $0x28] sm:$0xff]
    %v109 = vld [vmem:[#allocation3 + $0x30] sm:$0xff]
    %v110 = vld [vmem:[#allocation3 + $0x38] sm:$0xff]
    %v111 = vld [vmem:[#allocation3 + $0x40] sm:$0xff]
    %v112 = vld [vmem:[#allocation3 + $0x48] sm:$0xff]
    %v113 = vld [vmem:[#allocation3 + $0x50] sm:$0xff]
    %v114 = vld [vmem:[#allocation3 + $0x58] sm:$0xff]
    %v115 = vld [vmem:[#allocation3 + $0x60] sm:$0xff]
    %v116 = vld [vmem:[#allocation3 + $0x68] sm:$0xff]
    %v117 = vld [vmem:[#allocation3 + $0x70] sm:$0xff]
    %v118 = vld [vmem:[#allocation3 + $0x78] sm:$0xff]
    %v119 = vld [vmem:[%s80] sm:$0xff]
    %v120 = vld [vmem:[%s80 + $0x8] sm:$0xff]
    %v121 = vld [vmem:[%s80 + $0x10] sm:$0xff]
    %v122 = vld [vmem:[%s80 + $0x18] sm:$0xff]
    %v123 = vld [vmem:[%s87] sm:$0xff]
    %v124 = vld [vmem:[%s87 + $0x8] sm:$0xff]
    %v125 = vld [vmem:[%s87 + $0x10] sm:$0xff]
    %v126 = vld [vmem:[%s87 + $0x18] sm:$0xff]
    %v127 = vld [vmem:[%s94] sm:$0xff]
    %v128 = vld [vmem:[%s94 + $0x8] sm:$0xff]
    %v129 = vld [vmem:[%s94 + $0x10] sm:$0xff]
    %v130 = vld [vmem:[%s94 + $0x18] sm:$0xff]
    %v131 = vlaneseq
    %v132 = vand.u32 %v131, 127
    %133 = vset.pattern.permute.xlu0 0
    %134 = vperm.xlu0 %133, %v119
    %v135 = vpop.permute.xlu0 %134
    %136 = vset.pattern.permute.xlu0 0
    %137 = vperm.xlu0 %136, %v120
    %v138 = vpop.permute.xlu0 %137
    %139 = vset.pattern.permute.xlu0 0
    %140 = vperm.xlu0 %139, %v121
    %v141 = vpop.permute.xlu0 %140
    %142 = vset.pattern.permute.xlu0 0
    %143 = vperm.xlu0 %142, %v122
    %v144 = vpop.permute.xlu0 %143
    %vm145 = vcmp.eq.s32.totalorder %v132, %v135
    %vm146 = vcmp.eq.s32.totalorder %v132, %v138
    %vm147 = vcmp.eq.s32.totalorder %v132, %v141
    %vm148 = vcmp.eq.s32.totalorder %v132, %v144
    %v149 = vsel %vm145, 1.0, 0.0
    %v150 = vsel %vm146, 1.0, 0.0
    %v151 = vsel %vm147, 1.0, 0.0
    %v152 = vsel %vm148, 1.0, 0.0
    %153 = vset.pattern.permute.xlu0 0
    %154 = vperm.xlu0 %153, %v123
    %v155 = vpop.permute.xlu0 %154
    %156 = vset.pattern.permute.xlu0 0
    %157 = vperm.xlu0 %156, %v124
    %v158 = vpop.permute.xlu0 %157
    %159 = vset.pattern.permute.xlu0 0
    %160 = vperm.xlu0 %159, %v125
    %v161 = vpop.permute.xlu0 %160
    %162 = vset.pattern.permute.xlu0 0
    %163 = vperm.xlu0 %162, %v126
    %v164 = vpop.permute.xlu0 %163
    %vm165 = vcmp.eq.s32.totalorder %v132, %v155
    %vm166 = vcmp.eq.s32.totalorder %v132, %v158
    %vm167 = vcmp.eq.s32.totalorder %v132, %v161
    %vm168 = vcmp.eq.s32.totalorder %v132, %v164
    %v169 = vsel %vm165, 1.0, 0.0
    %v170 = vsel %vm166, 1.0, 0.0
    %v171 = vsel %vm167, 1.0, 0.0
    %v172 = vsel %vm168, 1.0, 0.0
    %v173 = vsub.f32 %v169, %v149
    %v174 = vsub.f32 %v170, %v150
    %v175 = vsub.f32 %v171, %v151
    %v176 = vsub.f32 %v172, %v152
    %177 = vset.pattern.permute.xlu0 0
    %178 = vperm.xlu0 %177, %v127
    %v179 = vpop.permute.xlu0 %178
    %180 = vset.pattern.permute.xlu0 0
    %181 = vperm.xlu0 %180, %v128
    %v182 = vpop.permute.xlu0 %181
    %183 = vset.pattern.permute.xlu0 0
    %184 = vperm.xlu0 %183, %v129
    %v185 = vpop.permute.xlu0 %184
    %186 = vset.pattern.permute.xlu0 0
    %187 = vperm.xlu0 %186, %v130
    %v188 = vpop.permute.xlu0 %187
    %vm189 = vcmp.eq.s32.totalorder %v132, %v179
    %vm190 = vcmp.eq.s32.totalorder %v132, %v182
    %vm191 = vcmp.eq.s32.totalorder %v132, %v185
    %vm192 = vcmp.eq.s32.totalorder %v132, %v188
    %v193 = vsel %vm189, 1.0, 0.0
    %v194 = vsel %vm190, 1.0, 0.0
    %v195 = vsel %vm191, 1.0, 0.0
    %v196 = vsel %vm192, 1.0, 0.0
    %v197 = vsub.f32 %v193, %v149
    %v198 = vsub.f32 %v194, %v150
    %v199 = vsub.f32 %v195, %v151
    %v200 = vsub.f32 %v196, %v152
    %201 = vmatprep.subr.mxu0 0.0
    %202 = vmatpush1.msra.mxu0 %v103
    %203 = vmatprep.subr.mxu0 0.0
    %204 = vmatpush1.msra.mxu0 %v104
    %205 = vmatprep.subr.mxu0 0.0
    %206 = vmatpush1.msra.mxu0 %v105
    %207 = vmatprep.subr.mxu0 0.0
    %208 = vmatpush1.msra.mxu0 %v106
    %209 = vmatprep.subr.mxu0 0.0
    %210 = vmatpush1.msra.mxu0 %v107
    %211 = vmatprep.subr.mxu0 0.0
    %212 = vmatpush1.msra.mxu0 %v108
    %213 = vmatprep.subr.mxu0 0.0
    %214 = vmatpush1.msra.mxu0 %v109
    %215 = vmatprep.subr.mxu0 0.0
    %216 = vmatpush1.msra.mxu0 %v110
    %217 = vmatprep.subr.mxu0 0.0
    %218 = vmatpush1.msra.mxu0 %v111
    %219 = vmatprep.subr.mxu0 0.0
    %220 = vmatpush1.msra.mxu0 %v112
    %221 = vmatprep.subr.mxu0 0.0
    %222 = vmatpush1.msra.mxu0 %v113
    %223 = vmatprep.subr.mxu0 0.0
    %224 = vmatpush1.msra.mxu0 %v114
    %225 = vmatprep.subr.mxu0 0.0
    %226 = vmatpush1.msra.mxu0 %v115
    %227 = vmatprep.subr.mxu0 0.0
    %228 = vmatpush1.msra.mxu0 %v116
    %229 = vmatprep.subr.mxu0 0.0
    %230 = vmatpush1.msra.mxu0 %v117
    %231 = vmatprep.subr.mxu0 0.0
    %232 = vmatpush1.msra.mxu0 %v118
    %233 = vmatprep.subr.mxu0 0.0
    %234 = vmatpush1.msra.mxu0 0.0
    %235 = vmatprep.subr.mxu0 0.0
    %236 = vmatpush1.msra.mxu0 0.0
    %237 = vmatprep.subr.mxu0 0.0
    %238 = vmatpush1.msra.mxu0 0.0
    %239 = vmatprep.subr.mxu0 0.0
    %240 = vmatpush1.msra.mxu0 0.0
    %241 = vmatprep.subr.mxu0 0.0
    %242 = vmatpush1.msra.mxu0 0.0
    %243 = vmatprep.subr.mxu0 0.0
    %244 = vmatpush1.msra.mxu0 0.0
    %245 = vmatprep.subr.mxu0 0.0
    %246 = vmatpush1.msra.mxu0 0.0
    %247 = vmatprep.subr.mxu0 0.0
    %248 = vmatpush1.msra.mxu0 0.0
    %249 = vmatprep.subr.mxu0 0.0
    %250 = vmatpush1.msra.mxu0 0.0
    %251 = vmatprep.subr.mxu0 0.0
    %252 = vmatpush1.msra.mxu0 0.0
    %253 = vmatprep.subr.mxu0 0.0
    %254 = vmatpush1.msra.mxu0 0.0
    %255 = vmatprep.subr.mxu0 0.0
    %256 = vmatpush1.msra.mxu0 0.0
    %257 = vmatprep.subr.mxu0 0.0
    %258 = vmatpush1.msra.mxu0 0.0
    %259 = vmatprep.subr.mxu0 0.0
    %260 = vmatpush1.msra.mxu0 0.0
    %261 = vmatprep.subr.mxu0 0.0
    %262 = vmatpush1.msra.mxu0 0.0
    %263 = vmatprep.subr.mxu0 0.0
    %264 = vmatpush1.msra.mxu0 0.0
    %265 = vmatprep.mubr.f32.mxu0 0.0
    %266 = vmatmul.mubr.f32.gmra.mrb[0].mxu0 %v173
    %v267 = vpop.f32.mrb[0].mxu0
    %v268 = vadd.f32 0.0, %v267
    %v269 = vpop.f32.mrb[0].mxu0
    %270 = vmatprep.mubr.f32.mxu0 0.0
    %271 = vmatmul.mubr.f32.gmra.mrb[0].mxu0 %v174
    %v272 = vpop.f32.mrb[0].mxu0
    %v273 = vadd.f32 0.0, %v272
    %v274 = vpop.f32.mrb[0].mxu0
    %275 = vmatprep.mubr.f32.mxu0 0.0
    %276 = vmatmul.mubr.f32.gmra.mrb[0].mxu0 %v175
    %v277 = vpop.f32.mrb[0].mxu0
    %v278 = vadd.f32 0.0, %v277
    %v279 = vpop.f32.mrb[0].mxu0
    %280 = vmatprep.mubr.f32.mxu0 0.0
    %281 = vmatmul.mubr.f32.gmra.mrb[0].mxu0 %v176
    %v282 = vpop.f32.mrb[0].mxu0
    %v283 = vadd.f32 0.0, %v282
    %v284 = vpop.f32.mrb[0].mxu0
    %285 = vdwg.mxu0
    %286 = vmatprep.subr.mxu0 0.0
    %287 = vmatpush1.msra.mxu0 %v103
    %288 = vmatprep.subr.mxu0 0.0
    %289 = vmatpush1.msra.mxu0 %v104
    %290 = vmatprep.subr.mxu0 0.0
    %291 = vmatpush1.msra.mxu0 %v105
    %292 = vmatprep.subr.mxu0 0.0
    %293 = vmatpush1.msra.mxu0 %v106
    %294 = vmatprep.subr.mxu0 0.0
    %295 = vmatpush1.msra.mxu0 %v107
    %296 = vmatprep.subr.mxu0 0.0
    %297 = vmatpush1.msra.mxu0 %v108
    %298 = vmatprep.subr.mxu0 0.0
    %299 = vmatpush1.msra.mxu0 %v109
    %300 = vmatprep.subr.mxu0 0.0
    %301 = vmatpush1.msra.mxu0 %v110
    %302 = vmatprep.subr.mxu0 0.0
    %303 = vmatpush1.msra.mxu0 %v111
    %304 = vmatprep.subr.mxu0 0.0
    %305 = vmatpush1.msra.mxu0 %v112
    %306 = vmatprep.subr.mxu0 0.0
    %307 = vmatpush1.msra.mxu0 %v113
    %308 = vmatprep.subr.mxu0 0.0
    %309 = vmatpush1.msra.mxu0 %v114
    %310 = vmatprep.subr.mxu0 0.0
    %311 = vmatpush1.msra.mxu0 %v115
    %312 = vmatprep.subr.mxu0 0.0
    %313 = vmatpush1.msra.mxu0 %v116
    %314 = vmatprep.subr.mxu0 0.0
    %315 = vmatpush1.msra.mxu0 %v117
    %316 = vmatprep.subr.mxu0 0.0
    %317 = vmatpush1.msra.mxu0 %v118
    %318 = vmatprep.subr.mxu0 0.0
    %319 = vmatpush1.msra.mxu0 0.0
    %320 = vmatprep.subr.mxu0 0.0
    %321 = vmatpush1.msra.mxu0 0.0
    %322 = vmatprep.subr.mxu0 0.0
    %323 = vmatpush1.msra.mxu0 0.0
    %324 = vmatprep.subr.mxu0 0.0
    %325 = vmatpush1.msra.mxu0 0.0
    %326 = vmatprep.subr.mxu0 0.0
    %327 = vmatpush1.msra.mxu0 0.0
    %328 = vmatprep.subr.mxu0 0.0
    %329 = vmatpush1.msra.mxu0 0.0
    %330 = vmatprep.subr.mxu0 0.0
    %331 = vmatpush1.msra.mxu0 0.0
    %332 = vmatprep.subr.mxu0 0.0
    %333 = vmatpush1.msra.mxu0 0.0
    %334 = vmatprep.subr.mxu0 0.0
    %335 = vmatpush1.msra.mxu0 0.0
    %336 = vmatprep.subr.mxu0 0.0
    %337 = vmatpush1.msra.mxu0 0.0
    %338 = vmatprep.subr.mxu0 0.0
    %339 = vmatpush1.msra.mxu0 0.0
    %340 = vmatprep.subr.mxu0 0.0
    %341 = vmatpush1.msra.mxu0 0.0
    %342 = vmatprep.subr.mxu0 0.0
    %343 = vmatpush1.msra.mxu0 0.0
    %344 = vmatprep.subr.mxu0 0.0
    %345 = vmatpush1.msra.mxu0 0.0
    %346 = vmatprep.subr.mxu0 0.0
    %347 = vmatpush1.msra.mxu0 0.0
    %348 = vmatprep.subr.mxu0 0.0
    %349 = vmatpush1.msra.mxu0 0.0
    %350 = vmatprep.mubr.f32.mxu0 0.0
    %351 = vmatmul.mubr.f32.gmra.mrb[0].mxu0 %v197
    %v352 = vpop.f32.mrb[0].mxu0
    %v353 = vadd.f32 0.0, %v352
    %v354 = vpop.f32.mrb[0].mxu0
    %355 = vmatprep.mubr.f32.mxu0 0.0
    %356 = vmatmul.mubr.f32.gmra.mrb[0].mxu0 %v198
    %v357 = vpop.f32.mrb[0].mxu0
    %v358 = vadd.f32 0.0, %v357
    %v359 = vpop.f32.mrb[0].mxu0
    %360 = vmatprep.mubr.f32.mxu0 0.0
    %361 = vmatmul.mubr.f32.gmra.mrb[0].mxu0 %v199
    %v362 = vpop.f32.mrb[0].mxu0
    %v363 = vadd.f32 0.0, %v362
    %v364 = vpop.f32.mrb[0].mxu0
    %365 = vmatprep.mubr.f32.mxu0 0.0
    %366 = vmatmul.mubr.f32.gmra.mrb[0].mxu0 %v200
    %v367 = vpop.f32.mrb[0].mxu0
    %v368 = vadd.f32 0.0, %v367
    %v369 = vpop.f32.mrb[0].mxu0
    %370 = vdwg.mxu0
    %v371 = vmul.f32 %v268, %v268
    %v372 = vmul.f32 %v273, %v273
    %v373 = vmul.f32 %v278, %v278
    %v374 = vmul.f32 %v283, %v283
    %375 = vadd.xlane.f32.xlu0 %v371
    %v376 = vpop.xlane.xlu0 %375
    %377 = vadd.xlane.f32.xlu0 %v372
    %v378 = vpop.xlane.xlu0 %377
    %379 = vadd.xlane.f32.xlu0 %v373
    %v380 = vpop.xlane.xlu0 %379
    %381 = vadd.xlane.f32.xlu0 %v374
    %v382 = vpop.xlane.xlu0 %381
    %v383 = vadd.f32 %v376, 1e-08
    %v384 = vadd.f32 %v378, 1e-08
    %v385 = vadd.f32 %v380, 1e-08
    %v386 = vadd.f32 %v382, 1e-08
    %v387 = vrsqrt.pop %v383
    %v388 = vmul.f32 %v383, %v387
    %vm389 = vcmp.eq.f32.partialorder %v383, inf
    %v390 = vsel %vm389, %v383, %v388
    %vm391 = vcmp.eq.f32.partialorder %v383, 0.0
    %v392 = vand.u32 %v383, 2147483648
    %v393 = vsel %vm391, %v392, %v390
    %v394 = vrsqrt.pop %v384
    %v395 = vmul.f32 %v384, %v394
    %vm396 = vcmp.eq.f32.partialorder %v384, inf
    %v397 = vsel %vm396, %v384, %v395
    %vm398 = vcmp.eq.f32.partialorder %v384, 0.0
    %v399 = vand.u32 %v384, 2147483648
    %v400 = vsel %vm398, %v399, %v397
    %v401 = vrsqrt.pop %v385
    %v402 = vmul.f32 %v385, %v401
    %vm403 = vcmp.eq.f32.partialorder %v385, inf
    %v404 = vsel %vm403, %v385, %v402
    %vm405 = vcmp.eq.f32.partialorder %v385, 0.0
    %v406 = vand.u32 %v385, 2147483648
    %v407 = vsel %vm405, %v406, %v404
    %v408 = vrsqrt.pop %v386
    %v409 = vmul.f32 %v386, %v408
    %vm410 = vcmp.eq.f32.partialorder %v386, inf
    %v411 = vsel %vm410, %v386, %v409
    %vm412 = vcmp.eq.f32.partialorder %v386, 0.0
    %v413 = vand.u32 %v386, 2147483648
    %v414 = vsel %vm412, %v413, %v411
    %v415 = vmul.f32 %v353, %v353
    %v416 = vmul.f32 %v358, %v358
    %v417 = vmul.f32 %v363, %v363
    %v418 = vmul.f32 %v368, %v368
    %419 = vadd.xlane.f32.xlu0 %v415
    %v420 = vpop.xlane.xlu0 %419
    %421 = vadd.xlane.f32.xlu0 %v416
    %v422 = vpop.xlane.xlu0 %421
    %423 = vadd.xlane.f32.xlu0 %v417
    %v424 = vpop.xlane.xlu0 %423
    %425 = vadd.xlane.f32.xlu0 %v418
    %v426 = vpop.xlane.xlu0 %425
    %v427 = vadd.f32 %v420, 1e-08
    %v428 = vadd.f32 %v422, 1e-08
    %v429 = vadd.f32 %v424, 1e-08
    %v430 = vadd.f32 %v426, 1e-08
    %v431 = vrsqrt.pop %v427
    %v432 = vmul.f32 %v427, %v431
    %vm433 = vcmp.eq.f32.partialorder %v427, inf
    %v434 = vsel %vm433, %v427, %v432
    %vm435 = vcmp.eq.f32.partialorder %v427, 0.0
    %v436 = vand.u32 %v427, 2147483648
    %v437 = vsel %vm435, %v436, %v434
    %v438 = vrsqrt.pop %v428
    %v439 = vmul.f32 %v428, %v438
    %vm440 = vcmp.eq.f32.partialorder %v428, inf
    %v441 = vsel %vm440, %v428, %v439
    %vm442 = vcmp.eq.f32.partialorder %v428, 0.0
    %v443 = vand.u32 %v428, 2147483648
    %v444 = vsel %vm442, %v443, %v441
    %v445 = vrsqrt.pop %v429
    %v446 = vmul.f32 %v429, %v445
    %vm447 = vcmp.eq.f32.partialorder %v429, inf
    %v448 = vsel %vm447, %v429, %v446
    %vm449 = vcmp.eq.f32.partialorder %v429, 0.0
    %v450 = vand.u32 %v429, 2147483648
    %v451 = vsel %vm449, %v450, %v448
    %v452 = vrsqrt.pop %v430
    %v453 = vmul.f32 %v430, %v452
    %vm454 = vcmp.eq.f32.partialorder %v430, inf
    %v455 = vsel %vm454, %v430, %v453
    %vm456 = vcmp.eq.f32.partialorder %v430, 0.0
    %v457 = vand.u32 %v430, 2147483648
    %v458 = vsel %vm456, %v457, %v455
    %s459 = sld [smem:[#allocation2]]
    %v460 = vstv %s459
    %v461 = vsub.f32 %v393, %v460
    %v462 = vsub.f32 %v400, %v460
    %v463 = vsub.f32 %v407, %v460
    %v464 = vsub.f32 %v414, %v460
    %v465 = vadd.f32 %v461, 0.2
    %v466 = vadd.f32 %v462, 0.2
    %v467 = vadd.f32 %v463, 0.2
    %v468 = vadd.f32 %v464, 0.2
    %v469 = vmax.f32 %v465, 0.0
    %v470 = vmax.f32 %v466, 0.0
    %v471 = vmax.f32 %v467, 0.0
    %v472 = vmax.f32 %v468, 0.0
    %v473 = vsub.f32 %v460, %v437
    %v474 = vsub.f32 %v460, %v444
    %v475 = vsub.f32 %v460, %v451
    %v476 = vsub.f32 %v460, %v458
    %v477 = vadd.f32 %v473, 0.2
    %v478 = vadd.f32 %v474, 0.2
    %v479 = vadd.f32 %v475, 0.2
    %v480 = vadd.f32 %v476, 0.2
    %v481 = vmax.f32 %v477, 0.0
    %v482 = vmax.f32 %v478, 0.0
    %v483 = vmax.f32 %v479, 0.0
    %v484 = vmax.f32 %v480, 0.0
    %s485 = smul.u32 %s96, 32
    %v486 = vlaneseq
    %v487 = vshrl.u32 %v486, 7
    %v488 = vadd.s32 %v487, 8
    %v489 = vadd.s32 %v487, 16
    %v490 = vadd.s32 %v487, 24
    %v491 = vstv %s485
    %v492 = vadd.s32 %v491, %v487
    %v493 = vadd.s32 %v491, %v488
    %v494 = vadd.s32 %v491, %v489
    %v495 = vadd.s32 %v491, %v490
    %vm496 = vcmp.lt.s32.totalorder %v492, 30
    %vm497 = vcmp.lt.s32.totalorder %v493, 30
    %vm498 = vcmp.lt.s32.totalorder %v494, 30
    %vm499 = vcmp.lt.s32.totalorder %v495, 30
    %v500 = vsel %vm496, 1, 0
    %v501 = vsel %vm497, 1, 0
    %v502 = vsel %vm498, 1, 0
    %v503 = vsel %vm499, 1, 0
    %v504 = vcvt.s32.f32 %v500
    %v505 = vcvt.s32.f32 %v501
    %v506 = vcvt.s32.f32 %v502
    %v507 = vcvt.s32.f32 %v503
    %v508 = vadd.f32 %v469, %v481
    %v509 = vadd.f32 %v470, %v482
    %v510 = vadd.f32 %v471, %v483
    %v511 = vadd.f32 %v472, %v484
    %v512 = vmul.f32 %v504, %v508
    %v513 = vmul.f32 %v505, %v509
    %v514 = vmul.f32 %v506, %v510
    %v515 = vmul.f32 %v507, %v511
    %vm516 = vcmask 7168
    %v517 = vsel %vm516, %v512, 0.0
    %v518 = vsel %vm516, %v513, 0.0
    %v519 = vadd.f32 %v517, %v518
    %v520 = vsel %vm516, %v514, 0.0
    %v521 = vadd.f32 %v519, %v520
    %v522 = vsel %vm516, %v515, 0.0
    %v523 = vadd.f32 %v521, %v522
    %524 = vadd.xlane.f32.xlu0 %v523
    %v525 = vpop.xlane.xlu0 %524
    %v526 = vrot.slane %v525, 4
    %v527 = vadd.f32 %v525, %v526
    %v528 = vrot.slane %v527, 2
    %v529 = vadd.f32 %v527, %v528
    %v530 = vrot.slane %v529, 1
    %v531 = vadd.f32 %v529, %v530
    %s532 = vtos %v531
    %vm533 = vcmp.gt.f32.partialorder %v469, 0.0
    %vm534 = vcmp.gt.f32.partialorder %v470, 0.0
    %vm535 = vcmp.gt.f32.partialorder %v471, 0.0
    %vm536 = vcmp.gt.f32.partialorder %v472, 0.0
    %vm537 = vcmp.gt.f32.partialorder %v481, 0.0
    %vm538 = vcmp.gt.f32.partialorder %v482, 0.0
    %vm539 = vcmp.gt.f32.partialorder %v483, 0.0
    %vm540 = vcmp.gt.f32.partialorder %v484, 0.0
    %vm541 = vmor %vm533, %vm537
    %vm542 = vmor %vm534, %vm538
    %vm543 = vmor %vm535, %vm539
    %vm544 = vmor %vm536, %vm540
    %v545 = vsel %vm541, 1, 0
    %v546 = vsel %vm542, 1, 0
    %v547 = vsel %vm543, 1, 0
    %v548 = vsel %vm544, 1, 0
    %v549 = vcvt.s32.f32 %v545
    %v550 = vcvt.s32.f32 %v546
    %v551 = vcvt.s32.f32 %v547
    %v552 = vcvt.s32.f32 %v548
    %v553 = vmul.f32 %v504, %v549
    %v554 = vmul.f32 %v505, %v550
    %v555 = vmul.f32 %v506, %v551
    %v556 = vmul.f32 %v507, %v552
    %v557 = vsel %vm516, %v553, 0.0
    %v558 = vsel %vm516, %v554, 0.0
    %v559 = vadd.f32 %v557, %v558
    %v560 = vsel %vm516, %v555, 0.0
    %v561 = vadd.f32 %v559, %v560
    %v562 = vsel %vm516, %v556, 0.0
    %v563 = vadd.f32 %v561, %v562
    %564 = vadd.xlane.f32.xlu0 %v563
    %v565 = vpop.xlane.xlu0 %564
    %v566 = vrot.slane %v565, 4
    %v567 = vadd.f32 %v565, %v566
    %v568 = vrot.slane %v567, 2
    %v569 = vadd.f32 %v567, %v568
    %v570 = vrot.slane %v569, 1
    %v571 = vadd.f32 %v569, %v570
    %s572 = vtos %v571
    %v573 = vld [vmem:[#allocation6] sm:$0xff]
    %v574 = vstv %s532
    %v575 = vadd.f32 %v573, %v574
    %576 = vst [vmem:[#allocation6] sm:$0xff] %v575
    %s577 = scalar_lea.vmem [#allocation6], 8
    %v578 = vld [vmem:[%s577] sm:$0xff]
    %v579 = vstv %s572
    %v580 = vadd.f32 %v578, %v579
    %581 = vst [vmem:[%s577] sm:$0xff] %v580
    // Predicated region
    $region30: #{tpu_custom_call.1} parent=1 // pred_check
      _
    $region31: #{tpu_custom_call.1} parent=1 // pred_check_branch
      %583 = sbr.rel (0) target = $region33
    $region32: #{tpu_custom_call.1} parent=1 // pred_region
      %s585 = ssub.s32 256, 256
      %586 = vsyncadd [#allocation5], %s585
      %s587 = sshll.u32 [#allocation6], 4
      %s588 = int_to_ptr.vmem [resolvable:$true] %s587
      %593 = dma.vmem_to_hbm [thread:$0]  %s588, 256, %s5, [#allocation5], 128, 128, 8
    $region33: #{tpu_custom_call.1} parent=1 // pred_fallthru
      _
    // Predicated region
    $region34: #{tpu_custom_call.1} parent=1 // pred_check
      _
    $region35: #{tpu_custom_call.1} parent=1 // pred_check_branch
      %595 = sbr.rel (0) target = $region37
    $region36: #{tpu_custom_call.1} parent=1 // pred_region
      %596 = dma.done [#allocation5], 256
    $region37: #{tpu_custom_call.1} parent=1 // pred_fallthru
      _
    %597 = vsyncpa [#allocation4], 1
    %598 = vsyncpa [#allocation5], 1

</llo_original>
